<compile_context>
chip_gen: v6e
topology: v6e:2x2x1
jax: 0.10.0
libtpu: 0.0.40
codegen_flags: <defaults>
</compile_context>

<pallas_src>
import math

import jax
import jax.numpy as jnp
from jax.experimental import pallas as pl
from jax.experimental.pallas import tpu as pltpu

_LANE = 128
_MAX_TP = 16384                       # hard cap on pixel-tile width (lanes)
_VMEM_BUDGET = 20 * 1024 * 1024       # bytes for double-buffered in+out tiles
_VMEM_LIMIT = 32 * 1024 * 1024        # scoped-VMEM limit (safe on v5e/v6e/v7x)


def _round_up(a, b):
    return -(-a // b) * b


# ----------------------------------------------------------------------------
# Pallas kernel: both branches fused.
#   x_ref, y_ref : (N, Cin, TP)   pixel columns (full batch in one block)
#   wx/wy        : (Cout, Cin)    BN-scale-folded 1x1 conv weights
#   bx/by        : (Cout, 1)      folded conv-bias + BN shift
#   ox/oy        : (N, Cout, TP)
# ----------------------------------------------------------------------------
def _mapping_kernel(x_ref, y_ref, wx_ref, bx_ref, wy_ref, by_ref, ox_ref, oy_ref):
    wx, bx = wx_ref[...], bx_ref[...]
    wy, by = wy_ref[...], by_ref[...]
    n = x_ref.shape[0]
    # N is small & static: unrolled per-batch (Cout, TP) lane-dense matmuls.
    for i in range(n):
        zx = jnp.dot(wx, x_ref[i], preferred_element_type=jnp.float32) + bx
        ox_ref[i] = jnp.maximum(zx, 0.1 * zx).astype(ox_ref.dtype)
        zy = jnp.dot(wy, y_ref[i], preferred_element_type=jnp.float32) + by
        oy_ref[i] = jnp.maximum(zy, 0.1 * zy).astype(oy_ref.dtype)


def _fused_mapping(xf, yf, wx, bx, wy, by, tp, out_dtype):
    """xf/yf: (N, Cin, Ppad) with Ppad % tp == 0. Returns two (N, Cout, Ppad)."""
    N, Cin, Ppad = xf.shape
    Cout = wx.shape[0]
    assert Ppad % tp == 0

    px_spec = pl.BlockSpec((N, Cin, tp), lambda p: (0, 0, p))
    w_spec = pl.BlockSpec((Cout, Cin), lambda p: (0, 0))
    b_spec = pl.BlockSpec((Cout, 1), lambda p: (0, 0))
    out_spec = pl.BlockSpec((N, Cout, tp), lambda p: (0, 0, p))

    return pl.pallas_call(
        _mapping_kernel,
        out_shape=(jax.ShapeDtypeStruct((N, Cout, Ppad), out_dtype),
                   jax.ShapeDtypeStruct((N, Cout, Ppad), out_dtype)),
        grid_spec=pltpu.PrefetchScalarGridSpec(
            num_scalar_prefetch=0,
            grid=(Ppad // tp,),
            in_specs=[px_spec, px_spec, w_spec, b_spec, w_spec, b_spec],
            out_specs=[out_spec, out_spec],
        ),
        compiler_params=pltpu.CompilerParams(
            dimension_semantics=("parallel",),
            vmem_limit_bytes=_VMEM_LIMIT),
    )(xf, yf, wx, bx, wy, by)


# ----------------------------------------------------------------------------
# Parameters: raw (PyTorch-like) init + one-time BN fold.
# ----------------------------------------------------------------------------
def init_coordinate_mapping_params(key, in_feat, out_feat):
    def branch(k):
        kw, kb, kg, kbeta, km, kv = jax.random.split(k, 6)
        bound = 1.0 / math.sqrt(in_feat)  # PyTorch Conv2d default init range
        w = jax.random.uniform(kw, (out_feat, in_feat), jnp.float32, -bound, bound)
        b = jax.random.uniform(kb, (out_feat,), jnp.float32, -bound, bound)
        gamma = 1.0 + 0.1 * jax.random.normal(kg, (out_feat,), jnp.float32)
        beta = 0.1 * jax.random.normal(kbeta, (out_feat,), jnp.float32)
        rmean = 0.1 * jax.random.normal(km, (out_feat,), jnp.float32)
        rvar = jnp.abs(1.0 + 0.1 * jax.random.normal(kv, (out_feat,), jnp.float32))
        return dict(w=w, b=b, gamma=gamma, beta=beta, rmean=rmean, rvar=rvar)

    kx, ky = jax.random.split(key)
    return {"mapping_x": branch(kx), "mapping_y": branch(ky)}


def fold_coordinate_mapping_params(params, eps=1e-5):
    """One-time: fold inference BatchNorm into conv weight (scale) + one bias."""
    def fold(p):
        scale = p["gamma"] / jnp.sqrt(p["rvar"] + eps)              # (Cout,)
        w_scaled = p["w"] * scale[:, None]                          # (Cout, Cin)
        bias = (p["beta"] + scale * (p["b"] - p["rmean"]))[:, None] # (Cout, 1)
        return w_scaled, bias

    wx, bx = fold(params["mapping_x"])
    wy, by = fold(params["mapping_y"])
    return {"wx": wx, "bx": bx, "wy": wy, "by": by}


# ----------------------------------------------------------------------------
# Forward (matches CoordinateMapping.forward, BN in inference mode)
# ----------------------------------------------------------------------------
def coordinate_mapping_forward(folded, x_coord, y_coord, out_dtype=None):
    # mimic the dim==3 -> unsqueeze(1) behavior
    if x_coord.ndim == 3:
        x_coord = x_coord[:, None, :, :]
    if y_coord.ndim == 3:
        y_coord = y_coord[:, None, :, :]
    assert x_coord.shape == y_coord.shape, "x/y coordinate maps must match"

    N, Cin, H, W = x_coord.shape
    P = H * W
    Cout = folded["wx"].shape[0]
    if out_dtype is None:
        out_dtype = x_coord.dtype  # default preserves module semantics (f32)

    # ---- pixel-tile selection: lane multiple, VMEM-budgeted, minimal padding.
    in_bytes = jnp.dtype(x_coord.dtype).itemsize
    out_bytes = jnp.dtype(out_dtype).itemsize
    # per pixel column: double-buffered (x & y inputs) + (x & y outputs)
    bytes_per_col = 2 * 2 * N * (Cin * in_bytes + Cout * out_bytes)
    tp_cap = min(_MAX_TP, _VMEM_BUDGET // max(bytes_per_col, 1))
    tp_cap = max(_LANE, (tp_cap // _LANE) * _LANE)

    p_lane = _round_up(P, _LANE)
    if p_lane <= tp_cap:
        tp, n_tiles = p_lane, 1
    else:
        n_tiles = -(-p_lane // tp_cap)
        tp = _round_up(-(-p_lane // n_tiles), _LANE)
    p_pad = tp * n_tiles

    def flat(a):
        a = a.reshape(N, Cin, P)  # pure reshape, no copy, native dtype
        if p_pad != P:
            a = jnp.pad(a, ((0, 0), (0, 0), (0, p_pad - P)))
        return a

    out_x, out_y = _fused_mapping(
        flat(x_coord), flat(y_coord),
        folded["wx"], folded["bx"], folded["wy"], folded["by"],
        tp, out_dtype)

    out_x = out_x[..., :P].reshape(N, Cout, H, W)  # already NCHW-flat
    out_y = out_y[..., :P].reshape(N, Cout, H, W)
    return out_x, out_y


# Pure-JAX reference for verification (unfused math, no Pallas)
def _reference_forward(params, x_coord, y_coord, eps=1e-5):
    if x_coord.ndim == 3:
        x_coord = x_coord[:, None, :, :]
    if y_coord.ndim == 3:
        y_coord = y_coord[:, None, :, :]

    def run(p, x):
        y = jnp.einsum("nchw,oc->nohw", x, p["w"]) + p["b"][None, :, None, None]
        scale = p["gamma"] / jnp.sqrt(p["rvar"] + eps)
        y = (y - p["rmean"][None, :, None, None]) * scale[None, :, None, None] \
            + p["beta"][None, :, None, None]
        return jnp.where(y > 0, y, 0.1 * y)

    return run(params["mapping_x"], x_coord), run(params["mapping_y"], y_coord)


if __name__ == "__main__":
    key = jax.random.PRNGKey(0)
    k_params, k_x, k_y = jax.random.split(key, 3)

    in_feat, out_feat = 4, 32
    N, H, W = 2, 16, 16

    params = init_coordinate_mapping_params(k_params, in_feat, out_feat)
    folded = fold_coordinate_mapping_params(params)  # one-time prep (feedback #9)

    x_coord = jax.random.normal(k_x, (N, in_feat, H, W), jnp.float32)
    y_coord = jax.random.normal(k_y, (N, in_feat, H, W), jnp.float32)

    x_embed, y_embed = coordinate_mapping_forward(folded, x_coord, y_coord)
    jax.block_until_ready((x_embed, y_embed))

    # correctness check against pure-JAX reference (all-f32 path)
    x_ref, y_ref = _reference_forward(params, x_coord, y_coord)
    assert x_embed.shape == (N, out_feat, H, W)
    assert y_embed.shape == (N, out_feat, H, W)
    assert jnp.allclose(x_embed, x_ref, atol=1e-4, rtol=1e-4)
    assert jnp.allclose(y_embed, y_ref, atol=1e-4, rtol=1e-4)

    print("KERNEL_OK")
</pallas_src>

<mosaic_0001>
module attributes {stable_mosaic.version = 11 : i64} {
  func.func @_mapping_kernel(%arg0: i32, %arg1: memref<2x4x256xf32, #tpu.memory_space<vmem>>, %arg2: memref<2x4x256xf32, #tpu.memory_space<vmem>>, %arg3: memref<32x4xf32, #tpu.memory_space<vmem>>, %arg4: memref<32x1xf32, #tpu.memory_space<vmem>>, %arg5: memref<32x4xf32, #tpu.memory_space<vmem>>, %arg6: memref<32x1xf32, #tpu.memory_space<vmem>>, %arg7: memref<2x32x256xf32, #tpu.memory_space<vmem>>, %arg8: memref<2x32x256xf32, #tpu.memory_space<vmem>>) attributes {dimension_semantics = [#tpu.dimension_semantics<parallel>], iteration_bounds = array<i64: 1>, scalar_prefetch = 0 : i64, scratch_operands = 0 : i64, tpu.core_type = #tpu.core_type<tc>, window_params = [{transform_indices = @transform_0, window_bounds = array<i64: 2, 4, 256>}, {transform_indices = @transform_1, window_bounds = array<i64: 2, 4, 256>}, {pipeline_mode = #tpu.pipeline_mode<synchronous>, transform_indices = @transform_2, window_bounds = array<i64: 32, 4>}, {pipeline_mode = #tpu.pipeline_mode<synchronous>, transform_indices = @transform_3, window_bounds = array<i64: 32, 1>}, {pipeline_mode = #tpu.pipeline_mode<synchronous>, transform_indices = @transform_4, window_bounds = array<i64: 32, 4>}, {pipeline_mode = #tpu.pipeline_mode<synchronous>, transform_indices = @transform_5, window_bounds = array<i64: 32, 1>}, {transform_indices = @transform_6, window_bounds = array<i64: 2, 32, 256>}, {transform_indices = @transform_7, window_bounds = array<i64: 2, 32, 256>}]} {
    %c0 = arith.constant 0 : index
    %c0_0 = arith.constant 0 : index
    %0 = vector.load %arg3[%c0, %c0_0] : memref<32x4xf32, #tpu.memory_space<vmem>>, vector<32x4xf32>
    %c0_1 = arith.constant 0 : index
    %c0_2 = arith.constant 0 : index
    %1 = vector.load %arg4[%c0_1, %c0_2] : memref<32x1xf32, #tpu.memory_space<vmem>>, vector<32x1xf32>
    %c0_3 = arith.constant 0 : index
    %c0_4 = arith.constant 0 : index
    %2 = vector.load %arg5[%c0_3, %c0_4] : memref<32x4xf32, #tpu.memory_space<vmem>>, vector<32x4xf32>
    %c0_5 = arith.constant 0 : index
    %c0_6 = arith.constant 0 : index
    %3 = vector.load %arg6[%c0_5, %c0_6] : memref<32x1xf32, #tpu.memory_space<vmem>>, vector<32x1xf32>
    %c0_7 = arith.constant 0 : index
    %c0_8 = arith.constant 0 : index
    %c0_9 = arith.constant 0 : index
    %4 = vector.load %arg1[%c0_7, %c0_8, %c0_9] : memref<2x4x256xf32, #tpu.memory_space<vmem>>, vector<1x4x256xf32>
    %5 = vector.shape_cast %4 : vector<1x4x256xf32> to vector<4x256xf32>
    %cst = arith.constant dense<0.000000e+00> : vector<32x256xf32>
    %6 = tpu.matmul %0, %5, %cst {dimension_numbers = #tpu.dot_dimension_numbers<[1], [0], [0], [1], [0, 0, 1, 1], [], []>} : vector<32x4xf32>, vector<4x256xf32>, vector<32x256xf32> -> vector<32x256xf32>
    %7 = vector.broadcast %1 : vector<32x1xf32> to vector<32x256xf32>
    %8 = arith.addf %6, %7 : vector<32x256xf32>
    %cst_10 = arith.constant 1.000000e-01 : f32
    %9 = vector.broadcast %cst_10 : f32 to vector<32x256xf32>
    %10 = arith.mulf %9, %8 : vector<32x256xf32>
    %11 = arith.maximumf %8, %10 : vector<32x256xf32>
    %c0_11 = arith.constant 0 : index
    %c0_12 = arith.constant 0 : index
    %c0_13 = arith.constant 0 : index
    %12 = vector.load %arg7[%c0_11, %c0_12, %c0_13] : memref<2x32x256xf32, #tpu.memory_space<vmem>>, vector<1x32x256xf32>
    %13 = vector.shape_cast %12 : vector<1x32x256xf32> to vector<32x256xf32>
    %14 = vector.shape_cast %11 : vector<32x256xf32> to vector<1x32x256xf32>
    tpu.vector_store %arg7[%c0_11, %c0_12, %c0_13], %14 {strides = array<i32>} : memref<2x32x256xf32, #tpu.memory_space<vmem>>, vector<1x32x256xf32>,
    %c0_14 = arith.constant 0 : index
    %c0_15 = arith.constant 0 : index
    %c0_16 = arith.constant 0 : index
    %15 = vector.load %arg2[%c0_14, %c0_15, %c0_16] : memref<2x4x256xf32, #tpu.memory_space<vmem>>, vector<1x4x256xf32>
    %16 = vector.shape_cast %15 : vector<1x4x256xf32> to vector<4x256xf32>
    %cst_17 = arith.constant dense<0.000000e+00> : vector<32x256xf32>
    %17 = tpu.matmul %2, %16, %cst_17 {dimension_numbers = #tpu.dot_dimension_numbers<[1], [0], [0], [1], [0, 0, 1, 1], [], []>} : vector<32x4xf32>, vector<4x256xf32>, vector<32x256xf32> -> vector<32x256xf32>
    %18 = vector.broadcast %3 : vector<32x1xf32> to vector<32x256xf32>
    %19 = arith.addf %17, %18 : vector<32x256xf32>
    %cst_18 = arith.constant 1.000000e-01 : f32
    %20 = vector.broadcast %cst_18 : f32 to vector<32x256xf32>
    %21 = arith.mulf %20, %19 : vector<32x256xf32>
    %22 = arith.maximumf %19, %21 : vector<32x256xf32>
    %c0_19 = arith.constant 0 : index
    %c0_20 = arith.constant 0 : index
    %c0_21 = arith.constant 0 : index
    %23 = vector.load %arg8[%c0_19, %c0_20, %c0_21] : memref<2x32x256xf32, #tpu.memory_space<vmem>>, vector<1x32x256xf32>
    %24 = vector.shape_cast %23 : vector<1x32x256xf32> to vector<32x256xf32>
    %25 = vector.shape_cast %22 : vector<32x256xf32> to vector<1x32x256xf32>
    tpu.vector_store %arg8[%c0_19, %c0_20, %c0_21], %25 {strides = array<i32>} : memref<2x32x256xf32, #tpu.memory_space<vmem>>, vector<1x32x256xf32>,
    %c1 = arith.constant 1 : index
    %c0_22 = arith.constant 0 : index
    %c0_23 = arith.constant 0 : index
    %26 = vector.load %arg1[%c1, %c0_22, %c0_23] : memref<2x4x256xf32, #tpu.memory_space<vmem>>, vector<1x4x256xf32>
    %27 = vector.shape_cast %26 : vector<1x4x256xf32> to vector<4x256xf32>
    %cst_24 = arith.constant dense<0.000000e+00> : vector<32x256xf32>
    %28 = tpu.matmul %0, %27, %cst_24 {dimension_numbers = #tpu.dot_dimension_numbers<[1], [0], [0], [1], [0, 0, 1, 1], [], []>} : vector<32x4xf32>, vector<4x256xf32>, vector<32x256xf32> -> vector<32x256xf32>
    %29 = vector.broadcast %1 : vector<32x1xf32> to vector<32x256xf32>
    %30 = arith.addf %28, %29 : vector<32x256xf32>
    %cst_25 = arith.constant 1.000000e-01 : f32
    %31 = vector.broadcast %cst_25 : f32 to vector<32x256xf32>
    %32 = arith.mulf %31, %30 : vector<32x256xf32>
    %33 = arith.maximumf %30, %32 : vector<32x256xf32>
    %c1_26 = arith.constant 1 : index
    %c0_27 = arith.constant 0 : index
    %c0_28 = arith.constant 0 : index
    %34 = vector.load %arg7[%c1_26, %c0_27, %c0_28] : memref<2x32x256xf32, #tpu.memory_space<vmem>>, vector<1x32x256xf32>
    %35 = vector.shape_cast %34 : vector<1x32x256xf32> to vector<32x256xf32>
    %36 = vector.shape_cast %33 : vector<32x256xf32> to vector<1x32x256xf32>
    tpu.vector_store %arg7[%c1_26, %c0_27, %c0_28], %36 {strides = array<i32>} : memref<2x32x256xf32, #tpu.memory_space<vmem>>, vector<1x32x256xf32>,
    %c1_29 = arith.constant 1 : index
    %c0_30 = arith.constant 0 : index
    %c0_31 = arith.constant 0 : index
    %37 = vector.load %arg2[%c1_29, %c0_30, %c0_31] : memref<2x4x256xf32, #tpu.memory_space<vmem>>, vector<1x4x256xf32>
    %38 = vector.shape_cast %37 : vector<1x4x256xf32> to vector<4x256xf32>
    %cst_32 = arith.constant dense<0.000000e+00> : vector<32x256xf32>
    %39 = tpu.matmul %2, %38, %cst_32 {dimension_numbers = #tpu.dot_dimension_numbers<[1], [0], [0], [1], [0, 0, 1, 1], [], []>} : vector<32x4xf32>, vector<4x256xf32>, vector<32x256xf32> -> vector<32x256xf32>
    %40 = vector.broadcast %3 : vector<32x1xf32> to vector<32x256xf32>
    %41 = arith.addf %39, %40 : vector<32x256xf32>
    %cst_33 = arith.constant 1.000000e-01 : f32
    %42 = vector.broadcast %cst_33 : f32 to vector<32x256xf32>
    %43 = arith.mulf %42, %41 : vector<32x256xf32>
    %44 = arith.maximumf %41, %43 : vector<32x256xf32>
    %c1_34 = arith.constant 1 : index
    %c0_35 = arith.constant 0 : index
    %c0_36 = arith.constant 0 : index
    %45 = vector.load %arg8[%c1_34, %c0_35, %c0_36] : memref<2x32x256xf32, #tpu.memory_space<vmem>>, vector<1x32x256xf32>
    %46 = vector.shape_cast %45 : vector<1x32x256xf32> to vector<32x256xf32>
    %47 = vector.shape_cast %44 : vector<32x256xf32> to vector<1x32x256xf32>
    tpu.vector_store %arg8[%c1_34, %c0_35, %c0_36], %47 {strides = array<i32>} : memref<2x32x256xf32, #tpu.memory_space<vmem>>, vector<1x32x256xf32>,
    return
  }
  func.func @transform_0(%arg0: i32) -> (i32, i32, i32) {
    %c0_i32 = arith.constant 0 : i32
    %c0_i32_0 = arith.constant 0 : i32
    %c0_i32_1 = arith.constant 0 : i32
    return %c0_i32, %c0_i32_0, %arg0 : i32, i32, i32
  }
  func.func @transform_1(%arg0: i32) -> (i32, i32, i32) {
    %c0_i32 = arith.constant 0 : i32
    %c0_i32_0 = arith.constant 0 : i32
    %c0_i32_1 = arith.constant 0 : i32
    return %c0_i32, %c0_i32_0, %arg0 : i32, i32, i32
  }
  func.func @transform_2(%arg0: i32) -> (i32, i32) {
    %c0_i32 = arith.constant 0 : i32
    %c0_i32_0 = arith.constant 0 : i32
    %c0_i32_1 = arith.constant 0 : i32
    return %c0_i32, %c0_i32_0 : i32, i32
  }
  func.func @transform_3(%arg0: i32) -> (i32, i32) {
    %c0_i32 = arith.constant 0 : i32
    %c0_i32_0 = arith.constant 0 : i32
    %c0_i32_1 = arith.constant 0 : i32
    return %c0_i32, %c0_i32_0 : i32, i32
  }
  func.func @transform_4(%arg0: i32) -> (i32, i32) {
    %c0_i32 = arith.constant 0 : i32
    %c0_i32_0 = arith.constant 0 : i32
    %c0_i32_1 = arith.constant 0 : i32
    return %c0_i32, %c0_i32_0 : i32, i32
  }
  func.func @transform_5(%arg0: i32) -> (i32, i32) {
    %c0_i32 = arith.constant 0 : i32
    %c0_i32_0 = arith.constant 0 : i32
    %c0_i32_1 = arith.constant 0 : i32
    return %c0_i32, %c0_i32_0 : i32, i32
  }
  func.func @transform_6(%arg0: i32) -> (i32, i32, i32) {
    %c0_i32 = arith.constant 0 : i32
    %c0_i32_0 = arith.constant 0 : i32
    %c0_i32_1 = arith.constant 0 : i32
    return %c0_i32, %c0_i32_0, %arg0 : i32, i32, i32
  }
  func.func @transform_7(%arg0: i32) -> (i32, i32, i32) {
    %c0_i32 = arith.constant 0 : i32
    %c0_i32_0 = arith.constant 0 : i32
    %c0_i32_1 = arith.constant 0 : i32
    return %c0_i32, %c0_i32_0, %arg0 : i32, i32, i32
  }
}

</mosaic_0001>

<llo_original>
// kernel: tpu_custom_call.1
$region0: #{tpu_custom_call.1}
  #allocation0 [shape = 'u32[]', space=smem, size = 0x4, offset = 0x4, fixed_abs, tag = 'smem constant byte address 0x4 - core index']
  #allocation1 [shape = 'u32[144,128]{1,0:T(1,128)}', space=vmem, size = 0x12000, scoped, tag = 'internal scratch']
  %s0 = inlined_call_operand.vmem [shape: f32[2,4,256], index: 0, kind: input, shape index: {}]
  %s1 = inlined_call_operand.vmem [shape: f32[2,4,256], index: 1, kind: input, shape index: {}]
  %s2 = inlined_call_operand.vmem [shape: f32[32,4], index: 2, kind: input, shape index: {}]
  %s3 = inlined_call_operand.vmem [shape: f32[32,1], index: 3, kind: input, shape index: {}]
  %s4 = inlined_call_operand.vmem [shape: f32[32,4], index: 4, kind: input, shape index: {}]
  %s5 = inlined_call_operand.vmem [shape: f32[32,1], index: 5, kind: input, shape index: {}]
  %s6 = inlined_call_operand.hbm [shape: f32[2,32,256], index: 6, kind: output, shape index: {0}]
  %s7 = inlined_call_operand.hbm [shape: f32[2,32,256], index: 7, kind: output, shape index: {1}]
  %8 = xla_tuple %s6, %s7
  %s9 = sld [smem:[#allocation0]]
  $region42: #{tpu_custom_call.1} parent=0
    _
  %s11 = ssub.s32 1, %s9
  %s12 = scalar_select 0, %s11, %s9
  $region1: #{tpu_custom_call.1} parent=0
    #allocation2 [shape = 'u8[65536]{0}', space=vmem, size = 0x10000, scoped, tag = 'output window, operand 0, single buffered']
    #allocation3 [shape = 's32[1]{0}', space=sflag, size = 0x4, scoped, tag = 'scoped memory for tpu_custom_call.1']
    #allocation4 [shape = 'u8[65536]{0}', space=vmem, size = 0x10000, scoped, tag = 'output window, operand 1, single buffered']
    #allocation5 [shape = 's32[1]{0}', space=sflag, size = 0x4, scoped, tag = 'scoped memory for tpu_custom_call.1']
    %13 = vsyncpa [#allocation3], 0
    %14 = vsyncpa [#allocation5], 0
    // Predicated region
    $region2: #{tpu_custom_call.1} parent=1 // pred_check
      _
    $region3: #{tpu_custom_call.1} parent=1 // pred_check_branch
      %16 = sbr.rel (0) target = $region5
    $region4: #{tpu_custom_call.1} parent=1 // pred_region
      _
    $region5: #{tpu_custom_call.1} parent=1 // pred_fallthru
      _
    // Predicated region
    $region6: #{tpu_custom_call.1} parent=1 // pred_check
      _
    $region7: #{tpu_custom_call.1} parent=1 // pred_check_branch
      %18 = sbr.rel (0) target = $region9
    $region8: #{tpu_custom_call.1} parent=1 // pred_region
      _
    $region9: #{tpu_custom_call.1} parent=1 // pred_fallthru
      _
    // Predicated region
    $region10: #{tpu_custom_call.1} parent=1 // pred_check
      _
    $region11: #{tpu_custom_call.1} parent=1 // pred_check_branch
      %20 = sbr.rel (0) target = $region13
    $region12: #{tpu_custom_call.1} parent=1 // pred_region
      _
    $region13: #{tpu_custom_call.1} parent=1 // pred_fallthru
      _
    // Predicated region
    $region14: #{tpu_custom_call.1} parent=1 // pred_check
      _
    $region15: #{tpu_custom_call.1} parent=1 // pred_check_branch
      %22 = sbr.rel (0) target = $region17
    $region16: #{tpu_custom_call.1} parent=1 // pred_region
      _
    $region17: #{tpu_custom_call.1} parent=1 // pred_fallthru
      _
    // Predicated region
    $region18: #{tpu_custom_call.1} parent=1 // pred_check
      _
    $region19: #{tpu_custom_call.1} parent=1 // pred_check_branch
      %24 = sbr.rel (0) target = $region21
    $region20: #{tpu_custom_call.1} parent=1 // pred_region
      _
    $region21: #{tpu_custom_call.1} parent=1 // pred_fallthru
      _
    // Predicated region
    $region22: #{tpu_custom_call.1} parent=1 // pred_check
      _
    $region23: #{tpu_custom_call.1} parent=1 // pred_check_branch
      %26 = sbr.rel (0) target = $region25
    $region24: #{tpu_custom_call.1} parent=1 // pred_region
      _
    $region25: #{tpu_custom_call.1} parent=1 // pred_fallthru
      _
    %v27 = vld [vmem:[%s2] sm:$0xff]
    %v28 = vld [vmem:[%s2 + $0x8] sm:$0xff]
    %v29 = vld [vmem:[%s2 + $0x10] sm:$0xff]
    %v30 = vld [vmem:[%s2 + $0x18] sm:$0xff]
    %v31 = vld [vmem:[%s3] sm:$0xff]
    %v32 = vld [vmem:[%s3 + $0x8] sm:$0xff]
    %v33 = vld [vmem:[%s3 + $0x10] sm:$0xff]
    %v34 = vld [vmem:[%s3 + $0x18] sm:$0xff]
    %v35 = vld [vmem:[%s4] sm:$0xff]
    %v36 = vld [vmem:[%s4 + $0x8] sm:$0xff]
    %v37 = vld [vmem:[%s4 + $0x10] sm:$0xff]
    %v38 = vld [vmem:[%s4 + $0x18] sm:$0xff]
    %v39 = vld [vmem:[%s5] sm:$0xff]
    %v40 = vld [vmem:[%s5 + $0x8] sm:$0xff]
    %v41 = vld [vmem:[%s5 + $0x10] sm:$0xff]
    %v42 = vld [vmem:[%s5 + $0x18] sm:$0xff]
    %v43 = vld [vmem:[%s0] sm:$0xff]
    %45 = vset.pattern.permute.xlu0 0
    %46 = vperm.xlu0 %45, %v31
    %v47 = vpop.permute.xlu0 %46
    %50 = vset.pattern.permute.xlu0 0
    %51 = vperm.xlu0 %50, %v32
    %v52 = vpop.permute.xlu0 %51
    %55 = vset.pattern.permute.xlu0 0
    %56 = vperm.xlu0 %55, %v33
    %v57 = vpop.permute.xlu0 %56
    %60 = vset.pattern.permute.xlu0 0
    %61 = vperm.xlu0 %60, %v34
    %v62 = vpop.permute.xlu0 %61
    %v65 = vcombine.high %v43, %v43
    %vm66 = vcmask 31744
    %v68 = vsel %vm66, %v27, 0
    %v71 = vsel %vm66, %v28, 0
    %v74 = vsel %vm66, %v29, 0
    %v77 = vsel %vm66, %v30, 0
    %vm79 = vcmask 1043456
    %v80 = vsel %vm79, %v43, 0
    %v82 = vsel %vm79, %v65, 0
    %84 = vmatprep.subr.mxu0 0.0
    %85 = vmatpush1.msra.mxu0 0.0
    %86 = vmatprep.subr.mxu0 0.0
    %87 = vmatpush1.msra.mxu0 0.0
    %88 = vmatprep.subr.mxu0 0.0
    %89 = vmatpush1.msra.mxu0 0.0
    %90 = vmatprep.subr.mxu0 0.0
    %91 = vmatpush1.msra.mxu0 0.0
    %92 = vmatprep.subr.mxu0 0.0
    %93 = vmatpush1.msra.mxu0 0.0
    %94 = vmatprep.subr.mxu0 0.0
    %95 = vmatpush1.msra.mxu0 0.0
    %96 = vmatprep.subr.mxu0 0.0
    %97 = vmatpush1.msra.mxu0 0.0
    %98 = vmatprep.subr.mxu0 0.0
    %99 = vmatpush1.msra.mxu0 0.0
    %100 = vmatprep.subr.mxu0 0.0
    %101 = vmatpush1.msra.mxu0 0.0
    %102 = vmatprep.subr.mxu0 0.0
    %103 = vmatpush1.msra.mxu0 0.0
    %104 = vmatprep.subr.mxu0 0.0
    %105 = vmatpush1.msra.mxu0 0.0
    %106 = vmatprep.subr.mxu0 0.0
    %107 = vmatpush1.msra.mxu0 0.0
    %108 = vmatprep.subr.mxu0 0.0
    %109 = vmatpush1.msra.mxu0 0.0
    %110 = vmatprep.subr.mxu0 0.0
    %111 = vmatpush1.msra.mxu0 0.0
    %112 = vmatprep.subr.mxu0 0.0
    %113 = vmatpush1.msra.mxu0 0.0
    %114 = vmatprep.subr.mxu0 %v82
    %115 = vmatpush1.msra.mxu0 %v80
    %116 = vmatprep.subr.mxu0 0.0
    %117 = vmatpush2.msra.mxu0 0.0
    %118 = vmatprep.subr.mxu0 0.0
    %119 = vmatpush2.msra.mxu0 0.0
    %120 = vmatprep.subr.mxu0 0.0
    %121 = vmatpush2.msra.mxu0 0.0
    %122 = vmatprep.subr.mxu0 0.0
    %123 = vmatpush2.msra.mxu0 0.0
    %124 = vmatprep.subr.mxu0 0.0
    %125 = vmatpush2.msra.mxu0 0.0
    %126 = vmatprep.subr.mxu0 0.0
    %127 = vmatpush2.msra.mxu0 0.0
    %128 = vmatprep.subr.mxu0 0.0
    %129 = vmatpush2.msra.mxu0 0.0
    %130 = vmatprep.subr.mxu0 0.0
    %131 = vmatpush2.msra.mxu0 0.0
    %132 = vmatprep.subr.mxu0 0.0
    %133 = vmatpush2.msra.mxu0 0.0
    %134 = vmatprep.subr.mxu0 0.0
    %135 = vmatpush2.msra.mxu0 0.0
    %136 = vmatprep.subr.mxu0 0.0
    %137 = vmatpush2.msra.mxu0 0.0
    %138 = vmatprep.subr.mxu0 0.0
    %139 = vmatpush2.msra.mxu0 0.0
    %140 = vmatprep.subr.mxu0 0.0
    %141 = vmatpush2.msra.mxu0 0.0
    %142 = vmatprep.subr.mxu0 0.0
    %143 = vmatpush2.msra.mxu0 0.0
    %144 = vmatprep.subr.mxu0 0.0
    %145 = vmatpush2.msra.mxu0 0.0
    %146 = vmatprep.subr.mxu0 0.0
    %147 = vmatpush2.msra.mxu0 0.0
    %148 = vmatprep.mubr.f32.mxu0 0.0
    %149 = vmatmul.mubr.f32.gmra.mxu0 %v68
    %v150 = vpop.f32.mrf.mxu0
    %v151 = vadd.f32 %v47, %v150
    %v152 = vpop.f32.mrf.mxu0
    %v153 = vadd.f32 %v47, %v152
    %154 = vmatprep.mubr.f32.mxu0 0.0
    %155 = vmatmul.mubr.f32.gmra.mxu0 %v71
    %v156 = vpop.f32.mrf.mxu0
    %v157 = vadd.f32 %v52, %v156
    %v158 = vpop.f32.mrf.mxu0
    %v159 = vadd.f32 %v52, %v158
    %160 = vmatprep.mubr.f32.mxu0 0.0
    %161 = vmatmul.mubr.f32.gmra.mxu0 %v74
    %v162 = vpop.f32.mrf.mxu0
    %v163 = vadd.f32 %v57, %v162
    %v164 = vpop.f32.mrf.mxu0
    %v165 = vadd.f32 %v57, %v164
    %166 = vmatprep.mubr.f32.mxu0 0.0
    %167 = vmatmul.mubr.f32.gmra.mxu0 %v77
    %v168 = vpop.f32.mrf.mxu0
    %v169 = vadd.f32 %v62, %v168
    %v170 = vpop.f32.mrf.mxu0
    %v171 = vadd.f32 %v62, %v170
    %172 = vdwg.mxu0
    %v173 = vmul.f32 %v151, 0.1
    %v174 = vmul.f32 %v153, 0.1
    %v175 = vmul.f32 %v157, 0.1
    %v176 = vmul.f32 %v159, 0.1
    %v177 = vmul.f32 %v163, 0.1
    %v178 = vmul.f32 %v165, 0.1
    %v179 = vmul.f32 %v169, 0.1
    %v180 = vmul.f32 %v171, 0.1
    %v181 = vmax.f32 %v151, %v173
    %v182 = vmax.f32 %v153, %v174
    %v183 = vmax.f32 %v157, %v175
    %v184 = vmax.f32 %v159, %v176
    %v185 = vmax.f32 %v163, %v177
    %v186 = vmax.f32 %v165, %v178
    %v187 = vmax.f32 %v169, %v179
    %v188 = vmax.f32 %v171, %v180
    %189 = vst [vmem:[#allocation2] sm:$0xff] %v181
    %190 = vst [vmem:[#allocation2 + $0x8] sm:$0xff] %v182
    %191 = vst [vmem:[#allocation2 + $0x10] sm:$0xff] %v183
    %192 = vst [vmem:[#allocation2 + $0x18] sm:$0xff] %v184
    %193 = vst [vmem:[#allocation2 + $0x20] sm:$0xff] %v185
    %194 = vst [vmem:[#allocation2 + $0x28] sm:$0xff] %v186
    %195 = vst [vmem:[#allocation2 + $0x30] sm:$0xff] %v187
    %196 = vst [vmem:[#allocation2 + $0x38] sm:$0xff] %v188
    %v197 = vld [vmem:[%s1] sm:$0xff]
    %199 = vset.pattern.permute.xlu0 0
    %200 = vperm.xlu0 %199, %v39
    %v201 = vpop.permute.xlu0 %200
    %204 = vset.pattern.permute.xlu0 0
    %205 = vperm.xlu0 %204, %v40
    %v206 = vpop.permute.xlu0 %205
    %209 = vset.pattern.permute.xlu0 0
    %210 = vperm.xlu0 %209, %v41
    %v211 = vpop.permute.xlu0 %210
    %214 = vset.pattern.permute.xlu0 0
    %215 = vperm.xlu0 %214, %v42
    %v216 = vpop.permute.xlu0 %215
    %v219 = vcombine.high %v197, %v197
    %v221 = vsel %vm66, %v35, 0
    %v224 = vsel %vm66, %v36, 0
    %v227 = vsel %vm66, %v37, 0
    %v230 = vsel %vm66, %v38, 0
    %v232 = vsel %vm79, %v197, 0
    %v234 = vsel %vm79, %v219, 0
    %236 = vmatprep.subr.mxu0 0.0
    %237 = vmatpush1.msra.mxu0 0.0
    %238 = vmatprep.subr.mxu0 0.0
    %239 = vmatpush1.msra.mxu0 0.0
    %240 = vmatprep.subr.mxu0 0.0
    %241 = vmatpush1.msra.mxu0 0.0
    %242 = vmatprep.subr.mxu0 0.0
    %243 = vmatpush1.msra.mxu0 0.0
    %244 = vmatprep.subr.mxu0 0.0
    %245 = vmatpush1.msra.mxu0 0.0
    %246 = vmatprep.subr.mxu0 0.0
    %247 = vmatpush1.msra.mxu0 0.0
    %248 = vmatprep.subr.mxu0 0.0
    %249 = vmatpush1.msra.mxu0 0.0
    %250 = vmatprep.subr.mxu0 0.0
    %251 = vmatpush1.msra.mxu0 0.0
    %252 = vmatprep.subr.mxu0 0.0
    %253 = vmatpush1.msra.mxu0 0.0
    %254 = vmatprep.subr.mxu0 0.0
    %255 = vmatpush1.msra.mxu0 0.0
    %256 = vmatprep.subr.mxu0 0.0
    %257 = vmatpush1.msra.mxu0 0.0
    %258 = vmatprep.subr.mxu0 0.0
    %259 = vmatpush1.msra.mxu0 0.0
    %260 = vmatprep.subr.mxu0 0.0
    %261 = vmatpush1.msra.mxu0 0.0
    %262 = vmatprep.subr.mxu0 0.0
    %263 = vmatpush1.msra.mxu0 0.0
    %264 = vmatprep.subr.mxu0 0.0
    %265 = vmatpush1.msra.mxu0 0.0
    %266 = vmatprep.subr.mxu0 %v234
    %267 = vmatpush1.msra.mxu0 %v232
    %268 = vmatprep.subr.mxu0 0.0
    %269 = vmatpush2.msra.mxu0 0.0
    %270 = vmatprep.subr.mxu0 0.0
    %271 = vmatpush2.msra.mxu0 0.0
    %272 = vmatprep.subr.mxu0 0.0
    %273 = vmatpush2.msra.mxu0 0.0
    %274 = vmatprep.subr.mxu0 0.0
    %275 = vmatpush2.msra.mxu0 0.0
    %276 = vmatprep.subr.mxu0 0.0
    %277 = vmatpush2.msra.mxu0 0.0
    %278 = vmatprep.subr.mxu0 0.0
    %279 = vmatpush2.msra.mxu0 0.0
    %280 = vmatprep.subr.mxu0 0.0
    %281 = vmatpush2.msra.mxu0 0.0
    %282 = vmatprep.subr.mxu0 0.0
    %283 = vmatpush2.msra.mxu0 0.0
    %284 = vmatprep.subr.mxu0 0.0
    %285 = vmatpush2.msra.mxu0 0.0
    %286 = vmatprep.subr.mxu0 0.0
    %287 = vmatpush2.msra.mxu0 0.0
    %288 = vmatprep.subr.mxu0 0.0
    %289 = vmatpush2.msra.mxu0 0.0
    %290 = vmatprep.subr.mxu0 0.0
    %291 = vmatpush2.msra.mxu0 0.0
    %292 = vmatprep.subr.mxu0 0.0
    %293 = vmatpush2.msra.mxu0 0.0
    %294 = vmatprep.subr.mxu0 0.0
    %295 = vmatpush2.msra.mxu0 0.0
    %296 = vmatprep.subr.mxu0 0.0
    %297 = vmatpush2.msra.mxu0 0.0
    %298 = vmatprep.subr.mxu0 0.0
    %299 = vmatpush2.msra.mxu0 0.0
    %300 = vmatprep.mubr.f32.mxu0 0.0
    %301 = vmatmul.mubr.f32.gmra.mxu0 %v221
    %v302 = vpop.f32.mrf.mxu0
    %v303 = vadd.f32 %v201, %v302
    %v304 = vpop.f32.mrf.mxu0
    %v305 = vadd.f32 %v201, %v304
    %306 = vmatprep.mubr.f32.mxu0 0.0
    %307 = vmatmul.mubr.f32.gmra.mxu0 %v224
    %v308 = vpop.f32.mrf.mxu0
    %v309 = vadd.f32 %v206, %v308
    %v310 = vpop.f32.mrf.mxu0
    %v311 = vadd.f32 %v206, %v310
    %312 = vmatprep.mubr.f32.mxu0 0.0
    %313 = vmatmul.mubr.f32.gmra.mxu0 %v227
    %v314 = vpop.f32.mrf.mxu0
    %v315 = vadd.f32 %v211, %v314
    %v316 = vpop.f32.mrf.mxu0
    %v317 = vadd.f32 %v211, %v316
    %318 = vmatprep.mubr.f32.mxu0 0.0
    %319 = vmatmul.mubr.f32.gmra.mxu0 %v230
    %v320 = vpop.f32.mrf.mxu0
    %v321 = vadd.f32 %v216, %v320
    %v322 = vpop.f32.mrf.mxu0
    %v323 = vadd.f32 %v216, %v322
    %324 = vdwg.mxu0
    %v325 = vmul.f32 %v303, 0.1
    %v326 = vmul.f32 %v305, 0.1
    %v327 = vmul.f32 %v309, 0.1
    %v328 = vmul.f32 %v311, 0.1
    %v329 = vmul.f32 %v315, 0.1
    %v330 = vmul.f32 %v317, 0.1
    %v331 = vmul.f32 %v321, 0.1
    %v332 = vmul.f32 %v323, 0.1
    %v333 = vmax.f32 %v303, %v325
    %v334 = vmax.f32 %v305, %v326
    %v335 = vmax.f32 %v309, %v327
    %v336 = vmax.f32 %v311, %v328
    %v337 = vmax.f32 %v315, %v329
    %v338 = vmax.f32 %v317, %v330
    %v339 = vmax.f32 %v321, %v331
    %v340 = vmax.f32 %v323, %v332
    %341 = vst [vmem:[#allocation4] sm:$0xff] %v333
    %342 = vst [vmem:[#allocation4 + $0x8] sm:$0xff] %v334
    %343 = vst [vmem:[#allocation4 + $0x10] sm:$0xff] %v335
    %344 = vst [vmem:[#allocation4 + $0x18] sm:$0xff] %v336
    %345 = vst [vmem:[#allocation4 + $0x20] sm:$0xff] %v337
    %346 = vst [vmem:[#allocation4 + $0x28] sm:$0xff] %v338
    %347 = vst [vmem:[#allocation4 + $0x30] sm:$0xff] %v339
    %348 = vst [vmem:[#allocation4 + $0x38] sm:$0xff] %v340
    %s349 = scalar_lea.vmem %s0, 8
    %v350 = vld [vmem:[%s349] sm:$0xff]
    %v352 = vcombine.high %v350, %v350
    %v353 = vsel %vm79, %v350, 0
    %v355 = vsel %vm79, %v352, 0
    %357 = vmatprep.subr.mxu0 0.0
    %358 = vmatpush1.msra.mxu0 0.0
    %359 = vmatprep.subr.mxu0 0.0
    %360 = vmatpush1.msra.mxu0 0.0
    %361 = vmatprep.subr.mxu0 0.0
    %362 = vmatpush1.msra.mxu0 0.0
    %363 = vmatprep.subr.mxu0 0.0
    %364 = vmatpush1.msra.mxu0 0.0
    %365 = vmatprep.subr.mxu0 0.0
    %366 = vmatpush1.msra.mxu0 0.0
    %367 = vmatprep.subr.mxu0 0.0
    %368 = vmatpush1.msra.mxu0 0.0
    %369 = vmatprep.subr.mxu0 0.0
    %370 = vmatpush1.msra.mxu0 0.0
    %371 = vmatprep.subr.mxu0 0.0
    %372 = vmatpush1.msra.mxu0 0.0
    %373 = vmatprep.subr.mxu0 0.0
    %374 = vmatpush1.msra.mxu0 0.0
    %375 = vmatprep.subr.mxu0 0.0
    %376 = vmatpush1.msra.mxu0 0.0
    %377 = vmatprep.subr.mxu0 0.0
    %378 = vmatpush1.msra.mxu0 0.0
    %379 = vmatprep.subr.mxu0 0.0
    %380 = vmatpush1.msra.mxu0 0.0
    %381 = vmatprep.subr.mxu0 0.0
    %382 = vmatpush1.msra.mxu0 0.0
    %383 = vmatprep.subr.mxu0 0.0
    %384 = vmatpush1.msra.mxu0 0.0
    %385 = vmatprep.subr.mxu0 0.0
    %386 = vmatpush1.msra.mxu0 0.0
    %387 = vmatprep.subr.mxu0 %v355
    %388 = vmatpush1.msra.mxu0 %v353
    %389 = vmatprep.subr.mxu0 0.0
    %390 = vmatpush2.msra.mxu0 0.0
    %391 = vmatprep.subr.mxu0 0.0
    %392 = vmatpush2.msra.mxu0 0.0
    %393 = vmatprep.subr.mxu0 0.0
    %394 = vmatpush2.msra.mxu0 0.0
    %395 = vmatprep.subr.mxu0 0.0
    %396 = vmatpush2.msra.mxu0 0.0
    %397 = vmatprep.subr.mxu0 0.0
    %398 = vmatpush2.msra.mxu0 0.0
    %399 = vmatprep.subr.mxu0 0.0
    %400 = vmatpush2.msra.mxu0 0.0
    %401 = vmatprep.subr.mxu0 0.0
    %402 = vmatpush2.msra.mxu0 0.0
    %403 = vmatprep.subr.mxu0 0.0
    %404 = vmatpush2.msra.mxu0 0.0
    %405 = vmatprep.subr.mxu0 0.0
    %406 = vmatpush2.msra.mxu0 0.0
    %407 = vmatprep.subr.mxu0 0.0
    %408 = vmatpush2.msra.mxu0 0.0
    %409 = vmatprep.subr.mxu0 0.0
    %410 = vmatpush2.msra.mxu0 0.0
    %411 = vmatprep.subr.mxu0 0.0
    %412 = vmatpush2.msra.mxu0 0.0
    %413 = vmatprep.subr.mxu0 0.0
    %414 = vmatpush2.msra.mxu0 0.0
    %415 = vmatprep.subr.mxu0 0.0
    %416 = vmatpush2.msra.mxu0 0.0
    %417 = vmatprep.subr.mxu0 0.0
    %418 = vmatpush2.msra.mxu0 0.0
    %419 = vmatprep.subr.mxu0 0.0
    %420 = vmatpush2.msra.mxu0 0.0
    %421 = vmatprep.mubr.f32.mxu0 0.0
    %422 = vmatmul.mubr.f32.gmra.mxu0 %v68
    %v423 = vpop.f32.mrf.mxu0
    %v424 = vadd.f32 %v47, %v423
    %v425 = vpop.f32.mrf.mxu0
    %v426 = vadd.f32 %v47, %v425
    %427 = vmatprep.mubr.f32.mxu0 0.0
    %428 = vmatmul.mubr.f32.gmra.mxu0 %v71
    %v429 = vpop.f32.mrf.mxu0
    %v430 = vadd.f32 %v52, %v429
    %v431 = vpop.f32.mrf.mxu0
    %v432 = vadd.f32 %v52, %v431
    %433 = vmatprep.mubr.f32.mxu0 0.0
    %434 = vmatmul.mubr.f32.gmra.mxu0 %v74
    %v435 = vpop.f32.mrf.mxu0
    %v436 = vadd.f32 %v57, %v435
    %v437 = vpop.f32.mrf.mxu0
    %v438 = vadd.f32 %v57, %v437
    %439 = vmatprep.mubr.f32.mxu0 0.0
    %440 = vmatmul.mubr.f32.gmra.mxu0 %v77
    %v441 = vpop.f32.mrf.mxu0
    %v442 = vadd.f32 %v62, %v441
    %v443 = vpop.f32.mrf.mxu0
    %v444 = vadd.f32 %v62, %v443
    %445 = vdwg.mxu0
    %v446 = vmul.f32 %v424, 0.1
    %v447 = vmul.f32 %v426, 0.1
    %v448 = vmul.f32 %v430, 0.1
    %v449 = vmul.f32 %v432, 0.1
    %v450 = vmul.f32 %v436, 0.1
    %v451 = vmul.f32 %v438, 0.1
    %v452 = vmul.f32 %v442, 0.1
    %v453 = vmul.f32 %v444, 0.1
    %v454 = vmax.f32 %v424, %v446
    %v455 = vmax.f32 %v426, %v447
    %v456 = vmax.f32 %v430, %v448
    %v457 = vmax.f32 %v432, %v449
    %v458 = vmax.f32 %v436, %v450
    %v459 = vmax.f32 %v438, %v451
    %v460 = vmax.f32 %v442, %v452
    %v461 = vmax.f32 %v444, %v453
    %s462 = scalar_lea.vmem [#allocation2], 64
    %463 = vst [vmem:[%s462] sm:$0xff] %v454
    %464 = vst [vmem:[%s462 + $0x8] sm:$0xff] %v455
    %465 = vst [vmem:[%s462 + $0x10] sm:$0xff] %v456
    %466 = vst [vmem:[%s462 + $0x18] sm:$0xff] %v457
    %467 = vst [vmem:[%s462 + $0x20] sm:$0xff] %v458
    %468 = vst [vmem:[%s462 + $0x28] sm:$0xff] %v459
    %469 = vst [vmem:[%s462 + $0x30] sm:$0xff] %v460
    %470 = vst [vmem:[%s462 + $0x38] sm:$0xff] %v461
    %s471 = scalar_lea.vmem %s1, 8
    %v472 = vld [vmem:[%s471] sm:$0xff]
    %v474 = vcombine.high %v472, %v472
    %v475 = vsel %vm79, %v472, 0
    %v477 = vsel %vm79, %v474, 0
    %479 = vmatprep.subr.mxu0 0.0
    %480 = vmatpush1.msra.mxu0 0.0
    %481 = vmatprep.subr.mxu0 0.0
    %482 = vmatpush1.msra.mxu0 0.0
    %483 = vmatprep.subr.mxu0 0.0
    %484 = vmatpush1.msra.mxu0 0.0
    %485 = vmatprep.subr.mxu0 0.0
    %486 = vmatpush1.msra.mxu0 0.0
    %487 = vmatprep.subr.mxu0 0.0
    %488 = vmatpush1.msra.mxu0 0.0
    %489 = vmatprep.subr.mxu0 0.0
    %490 = vmatpush1.msra.mxu0 0.0
    %491 = vmatprep.subr.mxu0 0.0
    %492 = vmatpush1.msra.mxu0 0.0
    %493 = vmatprep.subr.mxu0 0.0
    %494 = vmatpush1.msra.mxu0 0.0
    %495 = vmatprep.subr.mxu0 0.0
    %496 = vmatpush1.msra.mxu0 0.0
    %497 = vmatprep.subr.mxu0 0.0
    %498 = vmatpush1.msra.mxu0 0.0
    %499 = vmatprep.subr.mxu0 0.0
    %500 = vmatpush1.msra.mxu0 0.0
    %501 = vmatprep.subr.mxu0 0.0
    %502 = vmatpush1.msra.mxu0 0.0
    %503 = vmatprep.subr.mxu0 0.0
    %504 = vmatpush1.msra.mxu0 0.0
    %505 = vmatprep.subr.mxu0 0.0
    %506 = vmatpush1.msra.mxu0 0.0
    %507 = vmatprep.subr.mxu0 0.0
    %508 = vmatpush1.msra.mxu0 0.0
    %509 = vmatprep.subr.mxu0 %v477
    %510 = vmatpush1.msra.mxu0 %v475
    %511 = vmatprep.subr.mxu0 0.0
    %512 = vmatpush2.msra.mxu0 0.0
    %513 = vmatprep.subr.mxu0 0.0
    %514 = vmatpush2.msra.mxu0 0.0
    %515 = vmatprep.subr.mxu0 0.0
    %516 = vmatpush2.msra.mxu0 0.0
    %517 = vmatprep.subr.mxu0 0.0
    %518 = vmatpush2.msra.mxu0 0.0
    %519 = vmatprep.subr.mxu0 0.0
    %520 = vmatpush2.msra.mxu0 0.0
    %521 = vmatprep.subr.mxu0 0.0
    %522 = vmatpush2.msra.mxu0 0.0
    %523 = vmatprep.subr.mxu0 0.0
    %524 = vmatpush2.msra.mxu0 0.0
    %525 = vmatprep.subr.mxu0 0.0
    %526 = vmatpush2.msra.mxu0 0.0
    %527 = vmatprep.subr.mxu0 0.0
    %528 = vmatpush2.msra.mxu0 0.0
    %529 = vmatprep.subr.mxu0 0.0
    %530 = vmatpush2.msra.mxu0 0.0
    %531 = vmatprep.subr.mxu0 0.0
    %532 = vmatpush2.msra.mxu0 0.0
    %533 = vmatprep.subr.mxu0 0.0
    %534 = vmatpush2.msra.mxu0 0.0
    %535 = vmatprep.subr.mxu0 0.0
    %536 = vmatpush2.msra.mxu0 0.0
    %537 = vmatprep.subr.mxu0 0.0
    %538 = vmatpush2.msra.mxu0 0.0
    %539 = vmatprep.subr.mxu0 0.0
    %540 = vmatpush2.msra.mxu0 0.0
    %541 = vmatprep.subr.mxu0 0.0
    %542 = vmatpush2.msra.mxu0 0.0
    %543 = vmatprep.mubr.f32.mxu0 0.0
    %544 = vmatmul.mubr.f32.gmra.mxu0 %v221
    %v545 = vpop.f32.mrf.mxu0
    %v546 = vadd.f32 %v201, %v545
    %v547 = vpop.f32.mrf.mxu0
    %v548 = vadd.f32 %v201, %v547
    %549 = vmatprep.mubr.f32.mxu0 0.0
    %550 = vmatmul.mubr.f32.gmra.mxu0 %v224
    %v551 = vpop.f32.mrf.mxu0
    %v552 = vadd.f32 %v206, %v551
    %v553 = vpop.f32.mrf.mxu0
    %v554 = vadd.f32 %v206, %v553
    %555 = vmatprep.mubr.f32.mxu0 0.0
    %556 = vmatmul.mubr.f32.gmra.mxu0 %v227
    %v557 = vpop.f32.mrf.mxu0
    %v558 = vadd.f32 %v211, %v557
    %v559 = vpop.f32.mrf.mxu0
    %v560 = vadd.f32 %v211, %v559
    %561 = vmatprep.mubr.f32.mxu0 0.0
    %562 = vmatmul.mubr.f32.gmra.mxu0 %v230
    %v563 = vpop.f32.mrf.mxu0
    %v564 = vadd.f32 %v216, %v563
    %v565 = vpop.f32.mrf.mxu0
    %v566 = vadd.f32 %v216, %v565
    %567 = vdwg.mxu0
    %v568 = vmul.f32 %v546, 0.1
    %v569 = vmul.f32 %v548, 0.1
    %v570 = vmul.f32 %v552, 0.1
    %v571 = vmul.f32 %v554, 0.1
    %v572 = vmul.f32 %v558, 0.1
    %v573 = vmul.f32 %v560, 0.1
    %v574 = vmul.f32 %v564, 0.1
    %v575 = vmul.f32 %v566, 0.1
    %v576 = vmax.f32 %v546, %v568
    %v577 = vmax.f32 %v548, %v569
    %v578 = vmax.f32 %v552, %v570
    %v579 = vmax.f32 %v554, %v571
    %v580 = vmax.f32 %v558, %v572
    %v581 = vmax.f32 %v560, %v573
    %v582 = vmax.f32 %v564, %v574
    %v583 = vmax.f32 %v566, %v575
    %s584 = scalar_lea.vmem [#allocation4], 64
    %585 = vst [vmem:[%s584] sm:$0xff] %v576
    %586 = vst [vmem:[%s584 + $0x8] sm:$0xff] %v577
    %587 = vst [vmem:[%s584 + $0x10] sm:$0xff] %v578
    %588 = vst [vmem:[%s584 + $0x18] sm:$0xff] %v579
    %589 = vst [vmem:[%s584 + $0x20] sm:$0xff] %v580
    %590 = vst [vmem:[%s584 + $0x28] sm:$0xff] %v581
    %591 = vst [vmem:[%s584 + $0x30] sm:$0xff] %v582
    %592 = vst [vmem:[%s584 + $0x38] sm:$0xff] %v583
    // Predicated region
    $region26: #{tpu_custom_call.1} parent=1 // pred_check
      _
    $region27: #{tpu_custom_call.1} parent=1 // pred_check_branch
      %594 = sbr.rel (0) target = $region29
    $region28: #{tpu_custom_call.1} parent=1 // pred_region
      %s596 = ssub.s32 2048, 2048
      %597 = vsyncadd [#allocation3], %s596
      %s598 = sshll.u32 [#allocation2], 4
      %s599 = int_to_ptr.vmem [resolvable:$true] %s598
      %604 = dma.vmem_to_hbm [thread:$0]  %s599, 2048, %s6, [#allocation3], 256, 256, 16
    $region29: #{tpu_custom_call.1} parent=1 // pred_fallthru
      _
    // Predicated region
    $region30: #{tpu_custom_call.1} parent=1 // pred_check
      _
    $region31: #{tpu_custom_call.1} parent=1 // pred_check_branch
      %606 = sbr.rel (0) target = $region33
    $region32: #{tpu_custom_call.1} parent=1 // pred_region
      %s608 = ssub.s32 2048, 2048
      %609 = vsyncadd [#allocation5], %s608
      %s610 = sshll.u32 [#allocation4], 4
      %s611 = int_to_ptr.vmem [resolvable:$true] %s610
      %616 = dma.vmem_to_hbm [thread:$0]  %s611, 2048, %s7, [#allocation5], 256, 256, 16
    $region33: #{tpu_custom_call.1} parent=1 // pred_fallthru
      _
    // Predicated region
    $region34: #{tpu_custom_call.1} parent=1 // pred_check
      _
    $region35: #{tpu_custom_call.1} parent=1 // pred_check_branch
      %618 = sbr.rel (0) target = $region37
    $region36: #{tpu_custom_call.1} parent=1 // pred_region
      %619 = dma.done [#allocation3], 2048
    $region37: #{tpu_custom_call.1} parent=1 // pred_fallthru
      _
    // Predicated region
    $region38: #{tpu_custom_call.1} parent=1 // pred_check
      _
    $region39: #{tpu_custom_call.1} parent=1 // pred_check_branch
      %621 = sbr.rel (0) target = $region41
    $region40: #{tpu_custom_call.1} parent=1 // pred_region
      %622 = dma.done [#allocation5], 2048
    $region41: #{tpu_custom_call.1} parent=1 // pred_fallthru
      _
    %623 = vsyncpa [#allocation3], 1
    %624 = vsyncpa [#allocation5], 1

</llo_original>
